<compile_context>
chip_gen: v7x
topology: tpu7x:2x2x1
jax: 0.10.0
libtpu: 0.0.40
codegen_flags: <defaults>
</compile_context>

<pallas_src>
import functools

import jax
import jax.numpy as jnp
from jax.experimental import pallas as pl
from jax.experimental.pallas import tpu as pltpu

LANES = 128            # TPU lane width (last dim of the 2D view)
MAX_BLOCK_ROWS = 4096  # 4096 x 128 x 4B = 2 MiB f32 per input block


def _l1_partial_kernel(x_ref, y_ref, o_ref, *, block_rows, valid_rows, needs_mask):
    """Reduce one (block_rows, 128) tile pair to an (8, 128) partial sum of |x-y|."""
    diff = jnp.abs(x_ref[...].astype(jnp.float32) - y_ref[...].astype(jnp.float32))

    if needs_mask:
        # Last grid block may extend past the valid rows (Pallas pads ragged
        # blocks with unspecified data) -> zero those rows out.
        row0 = pl.program_id(0) * block_rows
        row_ids = row0 + jax.lax.broadcasted_iota(jnp.int32, diff.shape, 0)
        diff = jnp.where(row_ids < valid_rows, diff, 0.0)

    # (block_rows, 128) -> (block_rows//8, 8, 128); sum over axis 0 is pure
    # elementwise vreg adds on the VPU (no per-step cross-lane XLU reduce).
    partial = jnp.sum(diff.reshape(block_rows // 8, 8, LANES), axis=0)
    o_ref[...] = partial[None, :, :]


def l1_loss(x: jax.Array, y: jax.Array) -> jax.Array:
    """mean(|x - y|), matching LLoss.forward. Returns a float32 scalar."""
    assert x.shape == y.shape, "x and y must have identical shapes"
    n = x.size

    xf = jnp.ravel(x)
    yf = jnp.ravel(y)

    chunk = 8 * LANES                    # 1024 elems: keeps rows a multiple of 8
    n_bulk = (n // chunk) * chunk
    tail = n - n_bulk

    total = jnp.float32(0.0)

    if n_bulk:
        rows = n_bulk // LANES           # multiple of 8 by construction
        if tail:
            # rare ragged case: one bounded prefix slice (no full-array pad)
            xb = jax.lax.slice(xf, (0,), (n_bulk,))
            yb = jax.lax.slice(yf, (0,), (n_bulk,))
        else:
            xb, yb = xf, yf
        x2 = xb.reshape(rows, LANES)
        y2 = yb.reshape(rows, LANES)

        block_rows = min(MAX_BLOCK_ROWS, rows)   # both are multiples of 8
        grid = pl.cdiv(rows, block_rows)
        needs_mask = (rows % block_rows) != 0

        kernel = functools.partial(
            _l1_partial_kernel,
            block_rows=block_rows,
            valid_rows=rows,
            needs_mask=needs_mask,
        )

        partials = pl.pallas_call(
            kernel,
            out_shape=jax.ShapeDtypeStruct((grid, 8, LANES), jnp.float32),
            grid_spec=pltpu.PrefetchScalarGridSpec(
                num_scalar_prefetch=0,
                grid=(grid,),
                in_specs=[
                    pl.BlockSpec((block_rows, LANES), lambda i: (i, 0)),
                    pl.BlockSpec((block_rows, LANES), lambda i: (i, 0)),
                ],
                out_specs=pl.BlockSpec((1, 8, LANES), lambda i: (i, 0, 0)),
            ),
            compiler_params=pltpu.CompilerParams(
                # each step writes its own partial block -> megacore-shardable
                dimension_semantics=("parallel",),
            ),
        )(x2, y2)

        total = total + jnp.sum(partials, dtype=jnp.float32)

    if tail:
        # < 1024 leftover elements: negligible, handle with plain jnp
        xt = jax.lax.slice(xf, (n_bulk,), (n,)).astype(jnp.float32)
        yt = jax.lax.slice(yf, (n_bulk,), (n,)).astype(jnp.float32)
        total = total + jnp.sum(jnp.abs(xt - yt))

    return (total / jnp.float32(n)).astype(jnp.float32)


if __name__ == "__main__":
    key = jax.random.PRNGKey(0)
    kx, ky = jax.random.split(key)
    # small shapes consistent with an image-restoration loss: NCHW
    x = jax.random.normal(kx, (2, 4, 16, 16), dtype=jnp.float32)
    y = jax.random.normal(ky, (2, 4, 16, 16), dtype=jnp.float32)

    loss = jax.block_until_ready(l1_loss(x, y))

    # reference check (plain JAX, mirrors torch.mean(torch.abs(x - y)))
    ref = jnp.mean(jnp.abs(x - y))
    assert jnp.allclose(loss, ref, rtol=1e-6, atol=1e-6), (loss, ref)

    print("KERNEL_OK")
</pallas_src>

<mosaic_0001>
module attributes {stable_mosaic.version = 11 : i64} {
  func.func @_l1_partial_kernel(%arg0: i32, %arg1: memref<16x128xf32, #tpu.memory_space<vmem>>, %arg2: memref<16x128xf32, #tpu.memory_space<vmem>>, %arg3: memref<1x8x128xf32, #tpu.memory_space<vmem>>) attributes {dimension_semantics = [#tpu.dimension_semantics<parallel>], iteration_bounds = array<i64: 1>, scalar_prefetch = 0 : i64, scratch_operands = 0 : i64, tpu.core_type = #tpu.core_type<tc>, window_params = [{transform_indices = @transform_0, window_bounds = array<i64: 16, 128>}, {transform_indices = @transform_1, window_bounds = array<i64: 16, 128>}, {transform_indices = @transform_2, window_bounds = array<i64: 1, 8, 128>}]} {
    %c0 = arith.constant 0 : index
    %c0_0 = arith.constant 0 : index
    %0 = vector.load %arg1[%c0, %c0_0] : memref<16x128xf32, #tpu.memory_space<vmem>>, vector<16x128xf32>
    %c0_1 = arith.constant 0 : index
    %c0_2 = arith.constant 0 : index
    %1 = vector.load %arg2[%c0_1, %c0_2] : memref<16x128xf32, #tpu.memory_space<vmem>>, vector<16x128xf32>
    %2 = arith.subf %0, %1 : vector<16x128xf32>
    %3 = math.absf %2 : vector<16x128xf32>
    %4 = vector.shape_cast %3 : vector<16x128xf32> to vector<2x8x128xf32>
    %cst = arith.constant dense<0.000000e+00> : vector<8x128xf32>
    %5 = vector.multi_reduction <add>, %4, %cst [0] : vector<2x8x128xf32> to vector<8x128xf32>
    %6 = vector.shape_cast %5 : vector<8x128xf32> to vector<1x8x128xf32>
    %c0_3 = arith.constant 0 : index
    %c0_4 = arith.constant 0 : index
    %c0_5 = arith.constant 0 : index
    %7 = vector.load %arg3[%c0_3, %c0_4, %c0_5] : memref<1x8x128xf32, #tpu.memory_space<vmem>>, vector<1x8x128xf32>
    tpu.vector_store %arg3[%c0_3, %c0_4, %c0_5], %6 {strides = array<i32>} : memref<1x8x128xf32, #tpu.memory_space<vmem>>, vector<1x8x128xf32>,
    return
  }
  func.func @transform_0(%arg0: i32) -> (i32, i32) {
    %c0_i32 = arith.constant 0 : i32
    %c0_i32_0 = arith.constant 0 : i32
    return %arg0, %c0_i32 : i32, i32
  }
  func.func @transform_1(%arg0: i32) -> (i32, i32) {
    %c0_i32 = arith.constant 0 : i32
    %c0_i32_0 = arith.constant 0 : i32
    return %arg0, %c0_i32 : i32, i32
  }
  func.func @transform_2(%arg0: i32) -> (i32, i32, i32) {
    %c0_i32 = arith.constant 0 : i32
    %c0_i32_0 = arith.constant 0 : i32
    %c0_i32_1 = arith.constant 0 : i32
    return %arg0, %c0_i32, %c0_i32_0 : i32, i32, i32
  }
}

</mosaic_0001>

<llo_original>
// kernel: tpu_custom_call.1
$region0: #{tpu_custom_call.1}
  #allocation0 [shape = 'u32[]', space=smem, size = 0x4, offset = 0x4, fixed_abs, tag = 'smem constant byte address 0x4 - core index']
  #allocation1 [shape = 'u32[144,128]{1,0:T(1,128)}', space=vmem, size = 0x12000, scoped, tag = 'internal scratch']
  %s0 = inlined_call_operand.hbm [shape: f32[16,128], index: 0, kind: input, shape index: {}]
  %s1 = inlined_call_operand.hbm [shape: f32[16,128], index: 1, kind: input, shape index: {}]
  %s2 = inlined_call_operand.hbm [shape: f32[1,8,128], index: 2, kind: output, shape index: {}]
  %s3 = sld [smem:[#allocation0]]
  $region26: #{tpu_custom_call.1} parent=0
    _
  %s5 = ssub.s32 1, %s3
  %s6 = scalar_select 0, %s5, %s3
  $region1: #{tpu_custom_call.1} parent=0
    #allocation2 [shape = 'u8[8192]{0}', space=vmem, size = 0x2000, scoped, tag = 'input window, operand 0, single buffered']
    #allocation3 [shape = 's32[1]{0}', space=sflag, size = 0x4, scoped, tag = 'scoped memory for tpu_custom_call.1']
    #allocation4 [shape = 's32[1]{0}', space=sflag, size = 0x4, scoped, tag = 'scoped memory for tpu_custom_call.1']
    #allocation5 [shape = 'u8[8192]{0}', space=vmem, size = 0x2000, scoped, tag = 'input window, operand 1, single buffered']
    #allocation6 [shape = 's32[1]{0}', space=sflag, size = 0x4, scoped, tag = 'scoped memory for tpu_custom_call.1']
    #allocation7 [shape = 'u8[4096]{0}', space=vmem, size = 0x1000, scoped, tag = 'output window, operand 0, single buffered']
    %7 = vsyncpa [#allocation3], 0
    %8 = vsyncpa [#allocation6], 0
    %9 = vsyncpa [#allocation4], 0
    // Predicated region
    $region2: #{tpu_custom_call.1} parent=1 // pred_check
      _
    $region3: #{tpu_custom_call.1} parent=1 // pred_check_branch
      %11 = sbr.rel (0) target = $region5
    $region4: #{tpu_custom_call.1} parent=1 // pred_region
      %s13 = ssub.s32 256, 256
      %14 = vsyncadd [#allocation3], %s13
      %s15 = sshll.u32 [#allocation2], 4
      %s16 = int_to_ptr.vmem [resolvable:$true] %s15
      %21 = dma.hbm_to_vmem [thread:$0]  %s0, 256, %s16, [#allocation3], 128, 128, 8
    $region5: #{tpu_custom_call.1} parent=1 // pred_fallthru
      _
    // Predicated region
    $region6: #{tpu_custom_call.1} parent=1 // pred_check
      _
    $region7: #{tpu_custom_call.1} parent=1 // pred_check_branch
      %23 = sbr.rel (0) target = $region9
    $region8: #{tpu_custom_call.1} parent=1 // pred_region
      %s25 = ssub.s32 256, 256
      %26 = vsyncadd [#allocation6], %s25
      %s27 = sshll.u32 [#allocation5], 4
      %s28 = int_to_ptr.vmem [resolvable:$true] %s27
      %33 = dma.hbm_to_vmem [thread:$0]  %s1, 256, %s28, [#allocation6], 128, 128, 8
    $region9: #{tpu_custom_call.1} parent=1 // pred_fallthru
      _
    // Predicated region
    $region10: #{tpu_custom_call.1} parent=1 // pred_check
      _
    $region11: #{tpu_custom_call.1} parent=1 // pred_check_branch
      %35 = sbr.rel (0) target = $region13
    $region12: #{tpu_custom_call.1} parent=1 // pred_region
      %36 = dma.done [#allocation3], 256
    $region13: #{tpu_custom_call.1} parent=1 // pred_fallthru
      _
    // Predicated region
    $region14: #{tpu_custom_call.1} parent=1 // pred_check
      _
    $region15: #{tpu_custom_call.1} parent=1 // pred_check_branch
      %38 = sbr.rel (0) target = $region17
    $region16: #{tpu_custom_call.1} parent=1 // pred_region
      %39 = dma.done [#allocation6], 256
    $region17: #{tpu_custom_call.1} parent=1 // pred_fallthru
      _
    %v40 = vld [vmem:[#allocation2] sm:$0xff]
    %v41 = vld [vmem:[#allocation2 + $0x8] sm:$0xff]
    %v42 = vld [vmem:[#allocation5] sm:$0xff]
    %v43 = vld [vmem:[#allocation5 + $0x8] sm:$0xff]
    %v44 = vsub.f32 %v40, %v42
    %v45 = vsub.f32 %v41, %v43
    %v46 = vand.u32 2147483647, %v44
    %v47 = vand.u32 2147483647, %v45
    %v48 = vadd.f32 %v46, %v47
    %49 = vst [vmem:[#allocation7] sm:$0xff] %v48
    // Predicated region
    $region18: #{tpu_custom_call.1} parent=1 // pred_check
      _
    $region19: #{tpu_custom_call.1} parent=1 // pred_check_branch
      %51 = sbr.rel (0) target = $region21
    $region20: #{tpu_custom_call.1} parent=1 // pred_region
      %s53 = ssub.s32 128, 128
      %54 = vsyncadd [#allocation4], %s53
      %s56 = sshll.u32 [#allocation7], 4
      %s57 = int_to_ptr.vmem [resolvable:$true] %s56
      %59 = dma.vmem_to_hbm [thread:$0]  %s57, 128, %s2, [#allocation4]
    $region21: #{tpu_custom_call.1} parent=1 // pred_fallthru
      _
    // Predicated region
    $region22: #{tpu_custom_call.1} parent=1 // pred_check
      _
    $region23: #{tpu_custom_call.1} parent=1 // pred_check_branch
      %61 = sbr.rel (0) target = $region25
    $region24: #{tpu_custom_call.1} parent=1 // pred_region
      %62 = dma.done [#allocation4], 128
    $region25: #{tpu_custom_call.1} parent=1 // pred_fallthru
      _
    %63 = vsyncpa [#allocation3], 1
    %64 = vsyncpa [#allocation6], 1
    %65 = vsyncpa [#allocation4], 1

</llo_original>
